<compile_context>
chip_gen: v6e
topology: v6e:2x2x1
jax: 0.10.0
libtpu: 0.0.40
codegen_flags: <defaults>
</compile_context>

<pallas_src>
import functools
import math

import jax
import jax.numpy as jnp
from jax import lax
from jax.experimental import pallas as pl
from jax.experimental.pallas import tpu as pltpu

_LANES = 128
_MAX_TILE_ROWS = 2048  # 2048*128*4B = 1 MiB per buffer -> ~4 MiB with dbl-buffered in+out
_TWO_PI = 6.283185307179586
_INV_2P24 = 1.0 / 16777216.0


def _lowbias32(x):
    """Good-avalanche 32-bit integer hash (uint32 in, uint32 out)."""
    x = x ^ (x >> 16)
    x = x * jnp.uint32(0x7FEB352D)
    x = x ^ (x >> 15)
    x = x * jnp.uint32(0x846CA68B)
    x = x ^ (x >> 16)
    return x


def _random_gn_kernel(seed_ref, mean_ref, std_ref, x_ref, o_ref):
    """out = x + (z * (std/128) + mean/128), z ~ N(0,1) per element."""
    tile_r, lanes = x_ref.shape

    # Unique global element index for this tile (so tiles never repeat noise).
    row = lax.broadcasted_iota(jnp.uint32, (tile_r, lanes), 0)
    col = lax.broadcasted_iota(jnp.uint32, (tile_r, lanes), 1)
    base_row = (pl.program_id(0) * tile_r).astype(jnp.uint32)
    idx = (base_row + row) * jnp.uint32(lanes) + col

    # Two differently-keyed hash streams -> two uniforms in (0, 1).
    seed = seed_ref[0].astype(jnp.uint32)
    k1 = seed * jnp.uint32(0x85EBCA6B)
    k2 = k1 + jnp.uint32(0x9E3779B9)
    bits1 = _lowbias32(idx ^ k1)
    bits2 = _lowbias32(idx ^ k2)
    u1 = ((bits1 >> 8).astype(jnp.float32) + 0.5) * _INV_2P24
    u2 = ((bits2 >> 8).astype(jnp.float32) + 0.5) * _INV_2P24

    # Box-Muller -> standard normal.
    z = jnp.sqrt(-2.0 * jnp.log(u1)) * jnp.cos(_TWO_PI * u2)

    # std_ref / mean_ref are already pre-scaled by 1/128 on the host.
    noise = z * std_ref[0] + mean_ref[0]

    x = x_ref[...].astype(jnp.float32)
    o_ref[...] = (x + noise).astype(o_ref.dtype)


def _gn_add_noise_2d(x2d, seed, mean_s, std_s):
    rows, lanes = x2d.shape
    # Biggest tile that fits comfortably in VMEM on all chips; if the whole
    # slab is smaller, just use it directly (block == full array dims).
    tile_r = rows if rows <= _MAX_TILE_ROWS else _MAX_TILE_ROWS
    grid = (pl.cdiv(rows, tile_r),)

    return pl.pallas_call(
        _random_gn_kernel,
        out_shape=jax.ShapeDtypeStruct((rows, lanes), x2d.dtype),
        grid=grid,
        in_specs=[
            pl.BlockSpec(memory_space=pltpu.MemorySpace.SMEM),  # seed  (i32[1])
            pl.BlockSpec(memory_space=pltpu.MemorySpace.SMEM),  # mean/128 (f32[1])
            pl.BlockSpec(memory_space=pltpu.MemorySpace.SMEM),  # std/128  (f32[1])
            pl.BlockSpec((tile_r, lanes), lambda i: (i, 0)),    # image tile (VMEM)
        ],
        out_specs=pl.BlockSpec((tile_r, lanes), lambda i: (i, 0)),
        compiler_params=pltpu.CompilerParams(
            dimension_semantics=("parallel",),
        ),
    )(seed, mean_s, std_s, x2d)


@functools.partial(jax.jit, static_argnames=("min_var", "max_var", "mean"))
def random_gn(image_and_cover, key, *, min_var=3.0, max_var=10.0, mean=0.0):
    """JAX/Pallas port of RandomGN.forward."""
    image, _cover_image = image_and_cover  # cover image is unused, as in PyTorch

    k_var, k_seed = jax.random.split(key)
    # self.var = rand() * (max_var - min_var) + min_var ; noise std = sqrt(var)
    var = jax.random.uniform(k_var, (), dtype=jnp.float32) * (max_var - min_var) + min_var
    std_scaled = jnp.sqrt(var) * jnp.float32(1.0 / 128.0)       # sqrt(var)/128
    mean_scaled = jnp.full((1,), mean / 128.0, dtype=jnp.float32)
    std_arr = jnp.reshape(std_scaled, (1,)).astype(jnp.float32)
    seed = jax.random.randint(k_seed, (1,), 0, 2**31 - 1, dtype=jnp.int32)

    # Flatten NCHW -> lane-dense (rows, 128) slab.  Pad only when needed
    # (static check), and keep the image in its native dtype.
    orig_shape = image.shape
    total = math.prod(orig_shape)
    rows = pl.cdiv(total, _LANES)
    padded = rows * _LANES
    flat = image.reshape(-1)
    if padded != total:
        flat = jnp.pad(flat, (0, padded - total))
    x2d = flat.reshape(rows, _LANES)

    out2d = _gn_add_noise_2d(x2d, seed, mean_scaled, std_arr)

    out = out2d.reshape(-1)
    if padded != total:
        out = out[:total]
    return out.reshape(orig_shape)


if __name__ == "__main__":
    key = jax.random.PRNGKey(0)
    k_img, k_cov, k_noise = jax.random.split(key, 3)

    # Small NCHW shapes consistent with the module's expected input.
    image = jax.random.normal(k_img, (2, 4, 16, 16), dtype=jnp.float32)
    cover = jax.random.normal(k_cov, (2, 4, 16, 16), dtype=jnp.float32)

    out = random_gn((image, cover), k_noise)
    out = jax.block_until_ready(out)

    assert out.shape == image.shape, (out.shape, image.shape)
    assert out.dtype == image.dtype, (out.dtype, image.dtype)

    diff = out - image
    diff_std = float(jnp.std(diff))
    diff_mean = float(jnp.mean(diff))
    # var in [3, 10) -> noise std in [sqrt(3)/128, sqrt(10)/128] ~ [0.0135, 0.0247]
    assert 0.005 < diff_std < 0.05, diff_std
    assert abs(diff_mean) < 0.01, diff_mean

    print("KERNEL_OK")
</pallas_src>

<mosaic_0001>
module attributes {stable_mosaic.version = 11 : i64} {
  func.func @_random_gn_kernel(%arg0: i32, %arg1: memref<1xi32, #tpu.memory_space<smem>>, %arg2: memref<1xf32, #tpu.memory_space<smem>>, %arg3: memref<1xf32, #tpu.memory_space<smem>>, %arg4: memref<16x128xf32, #tpu.memory_space<vmem>>, %arg5: memref<16x128xf32, #tpu.memory_space<vmem>>) attributes {dimension_semantics = [#tpu.dimension_semantics<parallel>], iteration_bounds = array<i64: 1>, scalar_prefetch = 0 : i64, scratch_operands = 0 : i64, tpu.core_type = #tpu.core_type<tc>, window_params = [{transform_indices = @transform_0, window_bounds = array<i64: 1>}, {transform_indices = @transform_1, window_bounds = array<i64: 1>}, {transform_indices = @transform_2, window_bounds = array<i64: 1>}, {transform_indices = @transform_3, window_bounds = array<i64: 16, 128>}, {transform_indices = @transform_4, window_bounds = array<i64: 16, 128>}]} {
    %0 = tpu.iota {dimensions = array<i32: 0>} : vector<16x128xi32>
    %1 = tpu.iota {dimensions = array<i32: 1>} : vector<16x128xi32>
    %c16_i32 = arith.constant 16 : i32
    %2 = arith.muli %arg0, %c16_i32 : i32
    %3 = vector.broadcast %2 : i32 to vector<16x128xi32>
    %4 = arith.addi %3, %0 : vector<16x128xi32>
    %c128_i32 = arith.constant 128 : i32
    %5 = vector.broadcast %c128_i32 : i32 to vector<16x128xi32>
    %6 = arith.muli %4, %5 : vector<16x128xi32>
    %7 = arith.addi %6, %1 : vector<16x128xi32>
    %c0 = arith.constant 0 : index
    %8 = memref.load %arg1[%c0] : memref<1xi32, #tpu.memory_space<smem>>
    %c-2048144789_i32 = arith.constant -2048144789 : i32
    %9 = arith.muli %8, %c-2048144789_i32 : i32
    %c-1640531527_i32 = arith.constant -1640531527 : i32
    %10 = arith.addi %9, %c-1640531527_i32 : i32
    %11 = vector.broadcast %9 : i32 to vector<16x128xi32>
    %12 = arith.xori %7, %11 : vector<16x128xi32>
    %c16_i32_0 = arith.constant 16 : i32
    %13 = vector.broadcast %c16_i32_0 : i32 to vector<16x128xi32>
    %14 = arith.shrui %12, %13 : vector<16x128xi32>
    %15 = arith.xori %12, %14 : vector<16x128xi32>
    %c2146121005_i32 = arith.constant 2146121005 : i32
    %16 = vector.broadcast %c2146121005_i32 : i32 to vector<16x128xi32>
    %17 = arith.muli %15, %16 : vector<16x128xi32>
    %c15_i32 = arith.constant 15 : i32
    %18 = vector.broadcast %c15_i32 : i32 to vector<16x128xi32>
    %19 = arith.shrui %17, %18 : vector<16x128xi32>
    %20 = arith.xori %17, %19 : vector<16x128xi32>
    %c-2073254261_i32 = arith.constant -2073254261 : i32
    %21 = vector.broadcast %c-2073254261_i32 : i32 to vector<16x128xi32>
    %22 = arith.muli %20, %21 : vector<16x128xi32>
    %c16_i32_1 = arith.constant 16 : i32
    %23 = vector.broadcast %c16_i32_1 : i32 to vector<16x128xi32>
    %24 = arith.shrui %22, %23 : vector<16x128xi32>
    %25 = arith.xori %22, %24 : vector<16x128xi32>
    %26 = vector.broadcast %10 : i32 to vector<16x128xi32>
    %27 = arith.xori %7, %26 : vector<16x128xi32>
    %c16_i32_2 = arith.constant 16 : i32
    %28 = vector.broadcast %c16_i32_2 : i32 to vector<16x128xi32>
    %29 = arith.shrui %27, %28 : vector<16x128xi32>
    %30 = arith.xori %27, %29 : vector<16x128xi32>
    %c2146121005_i32_3 = arith.constant 2146121005 : i32
    %31 = vector.broadcast %c2146121005_i32_3 : i32 to vector<16x128xi32>
    %32 = arith.muli %30, %31 : vector<16x128xi32>
    %c15_i32_4 = arith.constant 15 : i32
    %33 = vector.broadcast %c15_i32_4 : i32 to vector<16x128xi32>
    %34 = arith.shrui %32, %33 : vector<16x128xi32>
    %35 = arith.xori %32, %34 : vector<16x128xi32>
    %c-2073254261_i32_5 = arith.constant -2073254261 : i32
    %36 = vector.broadcast %c-2073254261_i32_5 : i32 to vector<16x128xi32>
    %37 = arith.muli %35, %36 : vector<16x128xi32>
    %c16_i32_6 = arith.constant 16 : i32
    %38 = vector.broadcast %c16_i32_6 : i32 to vector<16x128xi32>
    %39 = arith.shrui %37, %38 : vector<16x128xi32>
    %40 = arith.xori %37, %39 : vector<16x128xi32>
    %c8_i32 = arith.constant 8 : i32
    %41 = vector.broadcast %c8_i32 : i32 to vector<16x128xi32>
    %42 = arith.shrui %25, %41 : vector<16x128xi32>
    %43 = arith.uitofp %42 : vector<16x128xi32> to vector<16x128xf32>
    %cst = arith.constant 5.000000e-01 : f32
    %44 = vector.broadcast %cst : f32 to vector<16x128xf32>
    %45 = arith.addf %43, %44 : vector<16x128xf32>
    %cst_7 = arith.constant 5.96046448E-8 : f32
    %46 = vector.broadcast %cst_7 : f32 to vector<16x128xf32>
    %47 = arith.mulf %45, %46 : vector<16x128xf32>
    %c8_i32_8 = arith.constant 8 : i32
    %48 = vector.broadcast %c8_i32_8 : i32 to vector<16x128xi32>
    %49 = arith.shrui %40, %48 : vector<16x128xi32>
    %50 = arith.uitofp %49 : vector<16x128xi32> to vector<16x128xf32>
    %cst_9 = arith.constant 5.000000e-01 : f32
    %51 = vector.broadcast %cst_9 : f32 to vector<16x128xf32>
    %52 = arith.addf %50, %51 : vector<16x128xf32>
    %cst_10 = arith.constant 5.96046448E-8 : f32
    %53 = vector.broadcast %cst_10 : f32 to vector<16x128xf32>
    %54 = arith.mulf %52, %53 : vector<16x128xf32>
    %55 = math.log %47 : vector<16x128xf32>
    %cst_11 = arith.constant -2.000000e+00 : f32
    %56 = vector.broadcast %cst_11 : f32 to vector<16x128xf32>
    %57 = arith.mulf %56, %55 : vector<16x128xf32>
    %58 = math.sqrt %57 : vector<16x128xf32>
    %cst_12 = arith.constant 6.28318548 : f32
    %59 = vector.broadcast %cst_12 : f32 to vector<16x128xf32>
    %60 = arith.mulf %59, %54 : vector<16x128xf32>
    %61 = math.cos %60 : vector<16x128xf32>
    %62 = arith.mulf %58, %61 : vector<16x128xf32>
    %c0_13 = arith.constant 0 : index
    %63 = memref.load %arg3[%c0_13] : memref<1xf32, #tpu.memory_space<smem>>
    %64 = vector.broadcast %63 : f32 to vector<16x128xf32>
    %65 = arith.mulf %62, %64 : vector<16x128xf32>
    %c0_14 = arith.constant 0 : index
    %66 = memref.load %arg2[%c0_14] : memref<1xf32, #tpu.memory_space<smem>>
    %67 = vector.broadcast %66 : f32 to vector<16x128xf32>
    %68 = arith.addf %65, %67 : vector<16x128xf32>
    %c0_15 = arith.constant 0 : index
    %c0_16 = arith.constant 0 : index
    %69 = vector.load %arg4[%c0_15, %c0_16] : memref<16x128xf32, #tpu.memory_space<vmem>>, vector<16x128xf32>
    %70 = arith.addf %69, %68 : vector<16x128xf32>
    %c0_17 = arith.constant 0 : index
    %c0_18 = arith.constant 0 : index
    %71 = vector.load %arg5[%c0_17, %c0_18] : memref<16x128xf32, #tpu.memory_space<vmem>>, vector<16x128xf32>
    tpu.vector_store %arg5[%c0_17, %c0_18], %70 {strides = array<i32>} : memref<16x128xf32, #tpu.memory_space<vmem>>, vector<16x128xf32>,
    return
  }
  func.func @transform_0(%arg0: i32) -> i32 {
    %c0_i32 = arith.constant 0 : i32
    %c0_i32_0 = arith.constant 0 : i32
    return %c0_i32 : i32
  }
  func.func @transform_1(%arg0: i32) -> i32 {
    %c0_i32 = arith.constant 0 : i32
    %c0_i32_0 = arith.constant 0 : i32
    return %c0_i32 : i32
  }
  func.func @transform_2(%arg0: i32) -> i32 {
    %c0_i32 = arith.constant 0 : i32
    %c0_i32_0 = arith.constant 0 : i32
    return %c0_i32 : i32
  }
  func.func @transform_3(%arg0: i32) -> (i32, i32) {
    %c0_i32 = arith.constant 0 : i32
    %c0_i32_0 = arith.constant 0 : i32
    return %arg0, %c0_i32 : i32, i32
  }
  func.func @transform_4(%arg0: i32) -> (i32, i32) {
    %c0_i32 = arith.constant 0 : i32
    %c0_i32_0 = arith.constant 0 : i32
    return %arg0, %c0_i32 : i32, i32
  }
}

</mosaic_0001>

<llo_original>
// kernel: random_gn.1
$region0: #{random_gn.1}
  #allocation0 [shape = 'u32[]', space=smem, size = 0x4, offset = 0x4, fixed_abs, tag = 'smem constant byte address 0x4 - core index']
  #allocation1 [shape = 'u32[144,128]{1,0:T(1,128)}', space=vmem, size = 0x12000, scoped, tag = 'internal scratch']
  #allocation2 [shape = 's32[1]{0:T(128)S(6)}', space=smem, size = 0x200, scoped, tag = 'scoped memory for random_gn.1']
  #allocation3 [shape = 'f32[1]{0:T(128)S(6)}', space=smem, size = 0x200, scoped, tag = 'scoped memory for random_gn.1']
  #allocation4 [shape = 'f32[1]{0:T(128)S(6)}', space=smem, size = 0x200, scoped, tag = 'scoped memory for random_gn.1']
  %s0 = inlined_call_operand.<no memory space> [shape: s32[1], index: 0, kind: input, shape index: {}]
  %s1 = inlined_call_operand.<no memory space> [shape: f32[1], index: 1, kind: input, shape index: {}]
  %s2 = inlined_call_operand.<no memory space> [shape: f32[1], index: 2, kind: input, shape index: {}]
  %s3 = inlined_call_operand.vmem [shape: f32[16,128], index: 3, kind: input, shape index: {}]
  %s4 = inlined_call_operand.vmem [shape: f32[16,128], index: 4, kind: output, shape index: {}]
  %s5 = sld [smem:[#allocation0]]
  $region26: #{random_gn.1} parent=0
    _
  %s7 = ssub.s32 1, %s5
  %s8 = scalar_select 0, %s7, %s5
  %9 = sst [smem:[#allocation2]] %s0
  %10 = sst [smem:[#allocation3]] %s1
  %11 = sst [smem:[#allocation4]] %s2
  // Predicated region
  $region2: #{random_gn.1} parent=0 // pred_check
    _
  $region3: #{random_gn.1} parent=0 // pred_check_branch
    %13 = sbr.rel (0) target = $region5
  $region4: #{random_gn.1} parent=0 // pred_region
    _
  $region5: #{random_gn.1} parent=0 // pred_fallthru
    _
  // Predicated region
  $region6: #{random_gn.1} parent=0 // pred_check
    _
  $region7: #{random_gn.1} parent=0 // pred_check_branch
    %15 = sbr.rel (0) target = $region9
  $region8: #{random_gn.1} parent=0 // pred_region
    _
  $region9: #{random_gn.1} parent=0 // pred_fallthru
    _
  // Predicated region
  $region10: #{random_gn.1} parent=0 // pred_check
    _
  $region11: #{random_gn.1} parent=0 // pred_check_branch
    %17 = sbr.rel (0) target = $region13
  $region12: #{random_gn.1} parent=0 // pred_region
    _
  $region13: #{random_gn.1} parent=0 // pred_fallthru
    _
  // Predicated region
  $region14: #{random_gn.1} parent=0 // pred_check
    _
  $region15: #{random_gn.1} parent=0 // pred_check_branch
    %19 = sbr.rel (0) target = $region17
  $region16: #{random_gn.1} parent=0 // pred_region
    _
  $region17: #{random_gn.1} parent=0 // pred_fallthru
    _
  %v20 = vlaneseq
  %v21 = vshrl.u32 %v20, 7
  %v22 = vadd.s32 %v21, 8
  %v23 = vlaneseq
  %v24 = vand.u32 %v23, 127
  %s25 = smul.u32 0, 16
  %v26 = vstv %s25
  %v27 = vadd.s32 %v26, %v21
  %v28 = vadd.s32 %v26, %v22
  %v29 = vmul.u32 %v27, 128
  %v30 = vmul.u32 %v28, 128
  %v31 = vadd.s32 %v29, %v24
  %v32 = vadd.s32 %v30, %v24
  %s33 = sld [smem:[#allocation2]]
  %s34 = smul.u32 %s33, 2246822507
  %s35 = sadd.s32 %s34, 2654435769
  %v36 = vstv %s34
  %v37 = vxor.u32 %v31, %v36
  %v38 = vxor.u32 %v32, %v36
  %v39 = vshrl.u32 %v37, 16
  %v40 = vshrl.u32 %v38, 16
  %v41 = vxor.u32 %v37, %v39
  %v42 = vxor.u32 %v38, %v40
  %v43 = vmul.u32 %v41, 2146121005
  %v44 = vmul.u32 %v42, 2146121005
  %v45 = vshrl.u32 %v43, 15
  %v46 = vshrl.u32 %v44, 15
  %v47 = vxor.u32 %v43, %v45
  %v48 = vxor.u32 %v44, %v46
  %v49 = vmul.u32 %v47, 2221713035
  %v50 = vmul.u32 %v48, 2221713035
  %v51 = vshrl.u32 %v49, 16
  %v52 = vshrl.u32 %v50, 16
  %v53 = vxor.u32 %v49, %v51
  %v54 = vxor.u32 %v50, %v52
  %v55 = vstv %s35
  %v56 = vxor.u32 %v31, %v55
  %v57 = vxor.u32 %v32, %v55
  %v58 = vshrl.u32 %v56, 16
  %v59 = vshrl.u32 %v57, 16
  %v60 = vxor.u32 %v56, %v58
  %v61 = vxor.u32 %v57, %v59
  %v62 = vmul.u32 %v60, 2146121005
  %v63 = vmul.u32 %v61, 2146121005
  %v64 = vshrl.u32 %v62, 15
  %v65 = vshrl.u32 %v63, 15
  %v66 = vxor.u32 %v62, %v64
  %v67 = vxor.u32 %v63, %v65
  %v68 = vmul.u32 %v66, 2221713035
  %v69 = vmul.u32 %v67, 2221713035
  %v70 = vshrl.u32 %v68, 16
  %v71 = vshrl.u32 %v69, 16
  %v72 = vxor.u32 %v68, %v70
  %v73 = vxor.u32 %v69, %v71
  %v74 = vshrl.u32 %v53, 8
  %v75 = vshrl.u32 %v54, 8
  %v76 = vshrl.u32 %v74, 16
  %v77 = vand.u32 %v74, 65535
  %v78 = vcvt.s32.f32 %v76
  %v79 = vmul.f32 %v78, 65536.0
  %v80 = vcvt.s32.f32 %v77
  %v81 = vadd.f32 %v79, %v80
  %v82 = vshrl.u32 %v75, 16
  %v83 = vand.u32 %v75, 65535
  %v84 = vcvt.s32.f32 %v82
  %v85 = vmul.f32 %v84, 65536.0
  %v86 = vcvt.s32.f32 %v83
  %v87 = vadd.f32 %v85, %v86
  %v88 = vadd.f32 %v81, 0.5
  %v89 = vadd.f32 %v87, 0.5
  %v90 = vmul.f32 %v88, 5.9604645e-08
  %v91 = vmul.f32 %v89, 5.9604645e-08
  %v92 = vshrl.u32 %v72, 8
  %v93 = vshrl.u32 %v73, 8
  %v94 = vshrl.u32 %v92, 16
  %v95 = vand.u32 %v92, 65535
  %v96 = vcvt.s32.f32 %v94
  %v97 = vmul.f32 %v96, 65536.0
  %v98 = vcvt.s32.f32 %v95
  %v99 = vadd.f32 %v97, %v98
  %v100 = vshrl.u32 %v93, 16
  %v101 = vand.u32 %v93, 65535
  %v102 = vcvt.s32.f32 %v100
  %v103 = vmul.f32 %v102, 65536.0
  %v104 = vcvt.s32.f32 %v101
  %v105 = vadd.f32 %v103, %v104
  %v106 = vadd.f32 %v99, 0.5
  %v107 = vadd.f32 %v105, 0.5
  %v108 = vmul.f32 %v106, 5.9604645e-08
  %v109 = vmul.f32 %v107, 5.9604645e-08
  %v110 = vlog2.pop %v90
  %v111 = vmul.f32 %v110, 0.6931472
  %v112 = vlog2.pop %v91
  %v113 = vmul.f32 %v112, 0.6931472
  %v114 = vmul.f32 %v111, -2.0
  %v115 = vmul.f32 %v113, -2.0
  %v116 = vrsqrt.pop %v114
  %v117 = vmul.f32 %v114, %v116
  %vm118 = vcmp.eq.f32.partialorder %v114, inf
  %v119 = vsel %vm118, %v114, %v117
  %vm120 = vcmp.eq.f32.partialorder %v114, 0.0
  %v121 = vand.u32 %v114, 2147483648
  %v122 = vsel %vm120, %v121, %v119
  %v123 = vrsqrt.pop %v115
  %v124 = vmul.f32 %v115, %v123
  %vm125 = vcmp.eq.f32.partialorder %v115, inf
  %v126 = vsel %vm125, %v115, %v124
  %vm127 = vcmp.eq.f32.partialorder %v115, 0.0
  %v128 = vand.u32 %v115, 2147483648
  %v129 = vsel %vm127, %v128, %v126
  %v130 = vmul.f32 %v108, 6.2831855
  %v131 = vmul.f32 %v109, 6.2831855
  %v132 = vand.u32 2147483647, %v130
  %vm133 = vcmp.le.f32.partialorder %v132, 0.7853982
  %vm134 = vcmp.lt.s32.totalorder %v130, 0
  %v135 = vand.u32 %v130, 2139095040
  %v136 = vshrl.u32 %v135, 23
  %v137 = vsub.s32 %v136, 127
  %v138 = vand.u32 2147483647, %v130
  %v139 = vand.u32 %v138, 8388607
  %v140 = vor.u32 %v139, 8388608
  %v141 = vsub.s32 0, %v140
  %v142 = vadd.s32 %v137, 1
  %vm143 = vcmp.gt.s32.totalorder %v142, 0
  %v144 = vsel %vm143, %v142, 0
  %v145 = vshrl.u32 %v144, 5
  %v146 = vand.u32 %v144, 31
  %v147 = vsub.s32 32, %v146
  %v148 = vshrl.u32 683565275, %v147
  %v149 = vshll.u32 683565275, %v146
  %v150 = vshrl.u32 2475754826, %v147
  %v151 = vor.u32 %v149, %v150
  %v152 = vshll.u32 2475754826, %v146
  %v153 = vshrl.u32 2131351028, %v147
  %v154 = vor.u32 %v152, %v153
  %v155 = vshll.u32 2131351028, %v146
  %v156 = vshrl.u32 2102212464, %v147
  %v157 = vor.u32 %v155, %v156
  %v158 = vshll.u32 2102212464, %v146
  %v159 = vshrl.u32 920167782, %v147
  %v160 = vor.u32 %v158, %v159
  %v161 = vshll.u32 920167782, %v146
  %v162 = vshrl.u32 1326507024, %v147
  %v163 = vor.u32 %v161, %v162
  %vm164 = vcmp.lt.s32.totalorder %v145, 1
  %vm165 = vcmp.lt.s32.totalorder %v145, 2
  %vm166 = vcmp.lt.s32.totalorder %v145, 3
  %vm167 = vcmp.lt.s32.totalorder %v145, 4
  %v168 = vsel %vm164, %v148, %v151
  %v169 = vsel %vm167, %v157, 2102212464
  %v170 = vsel %vm166, %v154, %v169
  %v171 = vsel %vm165, %v168, %v170
  %v172 = vsel %vm164, %v151, %v154
  %v173 = vsel %vm167, %v160, 920167782
  %v174 = vsel %vm166, %v157, %v173
  %v175 = vsel %vm165, %v172, %v174
  %v176 = vsel %vm164, %v154, %v157
  %v177 = vsel %vm167, %v163, 1326507024
  %v178 = vsel %vm166, %v160, %v177
  %v179 = vsel %vm165, %v176, %v178
  %v180 = vshll.u32 %v140, 8
  %v181 = vmul.u32.u64.compose %v180, %v179
  %v182 = vextract.low.u32 %v181
  %v183 = vextract.high.u32 %v181
  %v184 = vmul.u32.u64.compose %v180, %v175
  %v185 = vextract.low.u32 %v184
  %v186 = vextract.high.u32 %v184
  %v187 = vmul.u32 %v180, %v171
  %v188 = vadd.s32 %v183, %v185
  %vm189 = vc.u32 %v183, %v185
  %v190 = vadd.s32 %v186, 1
  %v191 = vsel %vm189, %v190, %v186
  %v192 = vadd.s32 %v187, %v191
  %v193 = vadd.s32 %v192, 536870912
  %v194 = vshrl.u32 %v193, 30
  %v195 = vshll.u32 %v194, 30
  %v196 = vsub.s32 %v192, %v195
  %vm197 = vcmp.lt.s32.totalorder %v196, 0
  %v198 = vsub.s32 0, %v196
  %v199 = vsel %vm197, %v198, %v196
  %v200 = vclz %v199
  %v201 = vsub.s32 %v200, 2
  %vm202 = vcmp.gt.s32.totalorder 0, %v201
  %v203 = vsel %vm202, 0, %v201
  %v204 = vsub.s32 32, %v203
  %v205 = vshll.u32 %v196, %v203
  %v206 = vshrl.u32 %v188, %v204
  %v207 = vor.u32 %v205, %v206
  %v208 = vsub.s32 4294967266, %v203
  %v209 = vadd.s32 %v208, 127
  %v210 = vshll.u32 %v209, 23
  %v211 = vor.u32 4788187, %v210
  %v212 = vand.u32 2147483647, %v211
  %v214 = vcvt.s32.f32 %v207
  %v215 = vmul.f32 %v214, %v212
  %v216 = vxor.u32 %v215, 2147483648
  %v217 = vsel %vm134, %v216, %v215
  %v218 = vsub.s32 4, %v194
  %v219 = vsel %vm134, %v218, %v194
  %v220 = vsel %vm133, %v130, %v217
  %v221 = vsel %vm133, 0, %v219
  %v222 = vcosq.f32.pop %v220
  %v223 = vsinq.f32.pop %v220
  %vm224 = vweird.f32 %v130
  %v225 = vand.u32 %v221, 3
  %vm226 = vcmp.lt.s32.totalorder %v225, 2
  %vm227 = vcmp.eq.s32.totalorder %v225, 0
  %v228 = vxor.u32 %v223, 2147483648
  %v229 = vsel %vm227, %v222, %v228
  %vm230 = vcmp.eq.s32.totalorder %v225, 2
  %v231 = vxor.u32 %v222, 2147483648
  %v232 = vsel %vm230, %v231, %v223
  %v233 = vsel %vm226, %v229, %v232
  %v234 = vsel %vm224, nan, %v233
  %v235 = vand.u32 2147483647, %v131
  %vm236 = vcmp.le.f32.partialorder %v235, 0.7853982
  %vm237 = vcmp.lt.s32.totalorder %v131, 0
  %v238 = vand.u32 %v131, 2139095040
  %v239 = vshrl.u32 %v238, 23
  %v240 = vsub.s32 %v239, 127
  %v241 = vand.u32 2147483647, %v131
  %v242 = vand.u32 %v241, 8388607
  %v243 = vor.u32 %v242, 8388608
  %v244 = vsub.s32 0, %v243
  %v245 = vadd.s32 %v240, 1
  %vm246 = vcmp.gt.s32.totalorder %v245, 0
  %v247 = vsel %vm246, %v245, 0
  %v248 = vshrl.u32 %v247, 5
  %v249 = vand.u32 %v247, 31
  %v250 = vsub.s32 32, %v249
  %v251 = vshrl.u32 683565275, %v250
  %v252 = vshll.u32 683565275, %v249
  %v253 = vshrl.u32 2475754826, %v250
  %v254 = vor.u32 %v252, %v253
  %v255 = vshll.u32 2475754826, %v249
  %v256 = vshrl.u32 2131351028, %v250
  %v257 = vor.u32 %v255, %v256
  %v258 = vshll.u32 2131351028, %v249
  %v259 = vshrl.u32 2102212464, %v250
  %v260 = vor.u32 %v258, %v259
  %v261 = vshll.u32 2102212464, %v249
  %v262 = vshrl.u32 920167782, %v250
  %v263 = vor.u32 %v261, %v262
  %v264 = vshll.u32 920167782, %v249
  %v265 = vshrl.u32 1326507024, %v250
  %v266 = vor.u32 %v264, %v265
  %vm267 = vcmp.lt.s32.totalorder %v248, 1
  %vm268 = vcmp.lt.s32.totalorder %v248, 2
  %vm269 = vcmp.lt.s32.totalorder %v248, 3
  %vm270 = vcmp.lt.s32.totalorder %v248, 4
  %v271 = vsel %vm267, %v251, %v254
  %v272 = vsel %vm270, %v260, 2102212464
  %v273 = vsel %vm269, %v257, %v272
  %v274 = vsel %vm268, %v271, %v273
  %v275 = vsel %vm267, %v254, %v257
  %v276 = vsel %vm270, %v263, 920167782
  %v277 = vsel %vm269, %v260, %v276
  %v278 = vsel %vm268, %v275, %v277
  %v279 = vsel %vm267, %v257, %v260
  %v280 = vsel %vm270, %v266, 1326507024
  %v281 = vsel %vm269, %v263, %v280
  %v282 = vsel %vm268, %v279, %v281
  %v283 = vshll.u32 %v243, 8
  %v284 = vmul.u32.u64.compose %v283, %v282
  %v285 = vextract.low.u32 %v284
  %v286 = vextract.high.u32 %v284
  %v287 = vmul.u32.u64.compose %v283, %v278
  %v288 = vextract.low.u32 %v287
  %v289 = vextract.high.u32 %v287
  %v290 = vmul.u32 %v283, %v274
  %v291 = vadd.s32 %v286, %v288
  %vm292 = vc.u32 %v286, %v288
  %v293 = vadd.s32 %v289, 1
  %v294 = vsel %vm292, %v293, %v289
  %v295 = vadd.s32 %v290, %v294
  %v296 = vadd.s32 %v295, 536870912
  %v297 = vshrl.u32 %v296, 30
  %v298 = vshll.u32 %v297, 30
  %v299 = vsub.s32 %v295, %v298
  %vm300 = vcmp.lt.s32.totalorder %v299, 0
  %v301 = vsub.s32 0, %v299
  %v302 = vsel %vm300, %v301, %v299
  %v303 = vclz %v302
  %v304 = vsub.s32 %v303, 2
  %vm305 = vcmp.gt.s32.totalorder 0, %v304
  %v306 = vsel %vm305, 0, %v304
  %v307 = vsub.s32 32, %v306
  %v308 = vshll.u32 %v299, %v306
  %v309 = vshrl.u32 %v291, %v307
  %v310 = vor.u32 %v308, %v309
  %v311 = vsub.s32 4294967266, %v306
  %v312 = vadd.s32 %v311, 127
  %v313 = vshll.u32 %v312, 23
  %v314 = vor.u32 4788187, %v313
  %v315 = vand.u32 2147483647, %v314
  %v317 = vcvt.s32.f32 %v310
  %v318 = vmul.f32 %v317, %v315
  %v319 = vxor.u32 %v318, 2147483648
  %v320 = vsel %vm237, %v319, %v318
  %v321 = vsub.s32 4, %v297
  %v322 = vsel %vm237, %v321, %v297
  %v323 = vsel %vm236, %v131, %v320
  %v324 = vsel %vm236, 0, %v322
  %v325 = vcosq.f32.pop %v323
  %v326 = vsinq.f32.pop %v323
  %vm327 = vweird.f32 %v131
  %v328 = vand.u32 %v324, 3
  %vm329 = vcmp.lt.s32.totalorder %v328, 2
  %vm330 = vcmp.eq.s32.totalorder %v328, 0
  %v331 = vxor.u32 %v326, 2147483648
  %v332 = vsel %vm330, %v325, %v331
  %vm333 = vcmp.eq.s32.totalorder %v328, 2
  %v334 = vxor.u32 %v325, 2147483648
  %v335 = vsel %vm333, %v334, %v326
  %v336 = vsel %vm329, %v332, %v335
  %v337 = vsel %vm327, nan, %v336
  %v338 = vmul.f32 %v122, %v234
  %v339 = vmul.f32 %v129, %v337
  %s340 = sld [smem:[#allocation4]]
  %v341 = vstv %s340
  %v342 = vmul.f32 %v338, %v341
  %v343 = vmul.f32 %v339, %v341
  %s344 = sld [smem:[#allocation3]]
  %v345 = vstv %s344
  %v346 = vadd.f32 %v342, %v345
  %v347 = vadd.f32 %v343, %v345
  %v348 = vld [vmem:[%s3] sm:$0xff]
  %v349 = vld [vmem:[%s3 + $0x8] sm:$0xff]
  %v350 = vadd.f32 %v348, %v346
  %v351 = vadd.f32 %v349, %v347
  %352 = vst [vmem:[%s4] sm:$0xff] %v350
  %353 = vst [vmem:[%s4 + $0x8] sm:$0xff] %v351
  // Predicated region
  $region18: #{random_gn.1} parent=0 // pred_check
    _
  $region19: #{random_gn.1} parent=0 // pred_check_branch
    %355 = sbr.rel (0) target = $region21
  $region20: #{random_gn.1} parent=0 // pred_region
    _
  $region21: #{random_gn.1} parent=0 // pred_fallthru
    _
  // Predicated region
  $region22: #{random_gn.1} parent=0 // pred_check
    _
  $region23: #{random_gn.1} parent=0 // pred_check_branch
    %357 = sbr.rel (0) target = $region25
  $region24: #{random_gn.1} parent=0 // pred_region
    _
  $region25: #{random_gn.1} parent=0 // pred_fallthru
    _

</llo_original>
